<compile_context>
chip_gen: v7x
topology: tpu7x:2x2x1
jax: 0.10.0
libtpu: 0.0.40
codegen_flags: <defaults>
</compile_context>

<pallas_src>
import numpy as np
import jax
import jax.numpy as jnp
from jax import lax
from jax.experimental import pallas as pl
from jax.experimental.pallas import tpu as pltpu


# ---------------- grouping glue (plain JAX: data-dependent sort/gather) ------
def square_distance(src, dst):
    # src [B,S,3], dst [B,N,3] -> [B,S,N]
    return jnp.sum((src[:, :, None, :] - dst[:, None, :, :]) ** 2, axis=-1)


def index_points(points, idx):
    # points [B,N,C], idx [B, ...] -> [B, ..., C]
    B = points.shape[0]
    batch = jnp.arange(B).reshape((B,) + (1,) * (idx.ndim - 1))
    return points[batch, idx]


def farthest_point_sample(xyz, npoint, key):
    B, N, _ = xyz.shape
    batch = jnp.arange(B)

    def body(i, state):
        distance, farthest, cents = state
        cents = cents.at[:, i].set(farthest)
        centroid = xyz[batch, farthest][:, None, :]
        dist = jnp.sum((xyz - centroid) ** 2, axis=-1)
        distance = jnp.minimum(distance, dist)
        farthest = jnp.argmax(distance, axis=-1).astype(jnp.int32)
        return distance, farthest, cents

    distance0 = jnp.full((B, N), 1e10, dtype=xyz.dtype)
    farthest0 = jax.random.randint(key, (B,), 0, N, dtype=jnp.int32)
    cents0 = jnp.zeros((B, npoint), dtype=jnp.int32)
    _, _, cents = lax.fori_loop(0, npoint, body, (distance0, farthest0, cents0))
    return cents


def query_ball_point(radius, nsample, xyz, new_xyz):
    B, N, _ = xyz.shape
    S = new_xyz.shape[1]
    sqrdists = square_distance(new_xyz, xyz)
    group_idx = jnp.broadcast_to(jnp.arange(N), (B, S, N))
    group_idx = jnp.where(sqrdists > radius ** 2, N, group_idx)
    group_idx = jnp.sort(group_idx, axis=-1)[:, :, :nsample]
    group_first = group_idx[:, :, :1]
    group_idx = jnp.where(group_idx == N, group_first, group_idx)
    return group_idx


def sample_and_group(npoint, radius, nsample, xyz, points, key):
    new_xyz = index_points(xyz, farthest_point_sample(xyz, npoint, key))  # [B,S,3]
    idx = query_ball_point(radius, nsample, xyz, new_xyz)                 # [B,S,K]
    grouped_xyz = index_points(xyz, idx)                                  # [B,S,K,3]
    grouped_xyz_norm = grouped_xyz - new_xyz[:, :, None, :]
    if points is not None:
        grouped_points = index_points(points, idx)                        # [B,S,K,D]
        new_points = jnp.concatenate([grouped_xyz_norm, grouped_points], axis=-1)
    else:
        new_points = grouped_xyz_norm
    return new_xyz, new_points


# ---------------- Pallas kernel: fused MLP (folded BN) + ReLU + max-pool -----
def _round_up(x, m):
    return ((x + m - 1) // m) * m


def _choose_ts(S, K, target_rows=1024):
    """Largest S-tile dividing S with TS*K <= target_rows, respecting the
    (8,128) sublane rule (TS % 8 == 0 or TS == S).  Bounds per-step VMEM
    (v7x's 64 MiB included) and gives the pipeline / megacore multiple
    grid steps while keeping per-step overhead amortized."""
    cands = [ts for ts in range(1, S + 1)
             if S % ts == 0 and (ts % 8 == 0 or ts == S)]
    fitting = [ts for ts in cands if ts * K <= target_rows]
    return max(fitting) if fitting else min(cands)


def make_sa_mlp_kernel(n_layers, TS, K):
    def kernel(x_ref, *refs):
        o_ref = refs[-1]
        prefs = refs[:-1]                          # 2 refs per layer: w', b'
        h = x_ref[...]                             # (TS*K, Cin) bf16
        for i in range(n_layers):
            w = prefs[2 * i][...]                  # bf16 (c_in, c_out), BN folded
            b = prefs[2 * i + 1][...]              # f32  (1, c_out),   BN folded
            acc = jnp.dot(h, w, preferred_element_type=jnp.float32)  # MXU, f32 acc
            a = jnp.maximum(acc + b, 0.0)          # bias + ReLU on VPU (f32)
            # bf16 operands for the next MXU layer; keep f32 for the final max.
            h = a.astype(jnp.bfloat16) if i + 1 < n_layers else a
        c_out = h.shape[-1]
        # rows are (s, k) with k innermost -> max over K is a sublane-group
        # reduce; c_out is padded to a multiple of 128 so the store is a
        # lane-dense unmasked vst.
        o_ref[...] = jnp.max(h.reshape(TS, K, c_out), axis=1)
    return kernel


def fold_bn_params(layer_params):
    """Fold eval-mode BN (scale/shift) and conv bias into the weights:
    w' = w * scale (per output column), b' = b * scale + shift."""
    fused = []
    for (w, b, sc, sh) in layer_params:
        fused.append((w * sc, b * sc + sh))
    return fused


def pointnet_sa_mlp(new_points, layer_params):
    """new_points: [B, S, K, Cin] f32; layer_params: list of (w, b, scale, shift)."""
    B, S, K, Cin = new_points.shape
    n_layers = len(layer_params)
    c_out = layer_params[-1][0].shape[-1]
    c_pad = _round_up(c_out, 128)                  # lane-dense output store

    fused = fold_bn_params(layer_params)
    if c_pad != c_out:                             # zero-pad last layer's columns
        w_l, b_l = fused[-1]
        w_l = jnp.pad(w_l, ((0, 0), (0, c_pad - c_out)))
        b_l = jnp.pad(b_l, ((0, 0), (0, c_pad - c_out)))
        fused[-1] = (w_l, b_l)
    # bf16 MXU operands; bias / ReLU / max stay in f32 (safe on v5e too).
    fused = [(w.astype(jnp.bfloat16), b.astype(jnp.float32)) for (w, b) in fused]

    TS = _choose_ts(S, K)
    # Flatten (S,K) -> rows in the wrapper so the kernel sees a layout-clean
    # [rows, Cin] block, and cast to bf16 there: numerically identical to the
    # in-kernel cast (first-layer MXU operands are bf16 either way) but halves
    # the grouped tensor's HBM->VMEM traffic.
    x = new_points.reshape(B, S * K, Cin).astype(jnp.bfloat16)

    in_specs = [pl.BlockSpec((None, TS * K, Cin), lambda b, s: (b, s, 0))]
    flat = []
    for (w, bias) in fused:
        flat += [w, bias]
        # Constant index_maps: weights/biases stay resident in VMEM.
        in_specs.append(pl.BlockSpec(w.shape, lambda b, s: (0, 0)))
        in_specs.append(pl.BlockSpec(bias.shape, lambda b, s: (0, 0)))

    flops = 2 * B * S * K * sum(int(w.shape[0]) * int(w.shape[1]) for w, _ in fused)
    bytes_accessed = (int(x.size) * 2
                      + sum(int(w.size) * 2 + int(bb.size) * 4 for w, bb in fused)
                      + B * S * c_pad * 4)

    out = pl.pallas_call(
        make_sa_mlp_kernel(n_layers, TS, K),
        out_shape=jax.ShapeDtypeStruct((B, S, c_pad), jnp.float32),
        grid=(B, S // TS),
        in_specs=in_specs,
        out_specs=pl.BlockSpec((None, TS, c_pad), lambda b, s: (b, s, 0)),
        compiler_params=pltpu.CompilerParams(
            dimension_semantics=("parallel", "parallel")),
        cost_estimate=pl.CostEstimate(
            flops=flops, transcendentals=0, bytes_accessed=bytes_accessed),
    )(x, *flat)
    return out[:, :, :c_out]


# ---------------- module wrapper ---------------------------------------------
def pointnet_set_abstraction(xyz, points, *, npoint, radius, nsample,
                             layer_params, key):
    new_xyz, new_points = sample_and_group(npoint, radius, nsample, xyz, points, key)
    new_feat = pointnet_sa_mlp(new_points.astype(jnp.float32), layer_params)
    return new_xyz, new_feat


# ---------------- deterministic parameter construction -----------------------
def make_params(key, in_channel, mlp):
    # Conv2d(c_in, c_out, 1) weight stored transposed [c_in, c_out].
    # BatchNorm2d eval-mode: (gamma, beta, mean, var) -> scale/shift.
    params = []
    c_in = in_channel
    for c_out in mlp:
        key, kw, kb, kg, kbeta, km, kv = jax.random.split(key, 7)
        w = 0.2 * jax.random.normal(kw, (c_in, c_out), jnp.float32)
        b = 0.1 * jax.random.normal(kb, (1, c_out), jnp.float32)
        gamma = 1.0 + 0.1 * jax.random.normal(kg, (1, c_out), jnp.float32)
        beta = 0.1 * jax.random.normal(kbeta, (1, c_out), jnp.float32)
        mean = 0.1 * jax.random.normal(km, (1, c_out), jnp.float32)
        var = 0.5 + jnp.abs(jax.random.normal(kv, (1, c_out), jnp.float32))
        scale = gamma / jnp.sqrt(var + 1e-5)
        shift = beta - mean * scale
        params.append((w, b, scale, shift))
        c_in = c_out
    return params


def reference_mlp(new_points, layer_params):
    h = np.asarray(new_points, dtype=np.float32)            # [B,S,K,C]
    for (w, b, sc, sh) in layer_params:
        h = h @ np.asarray(w) + np.asarray(b)
        h = np.maximum(h * np.asarray(sc) + np.asarray(sh), 0.0)
    return h.max(axis=2)                                     # max over K -> [B,S,Cout]


if __name__ == "__main__":
    B, N, D = 2, 64, 5
    npoint, radius, nsample = 16, 0.4, 8
    in_channel = 3 + D
    mlp = [16, 32]

    key = jax.random.PRNGKey(0)
    kxyz, kpts, kfps, kparam = jax.random.split(key, 4)
    xyz = jax.random.uniform(kxyz, (B, N, 3), jnp.float32)
    points = jax.random.normal(kpts, (B, N, D), jnp.float32)
    layer_params = make_params(kparam, in_channel, mlp)

    new_xyz, new_feat = pointnet_set_abstraction(
        xyz, points, npoint=npoint, radius=radius, nsample=nsample,
        layer_params=layer_params, key=kfps)
    jax.block_until_ready((new_xyz, new_feat))

    # correctness check against a pure numpy reference of the hot path
    # (bf16 MXU operands -> slightly relaxed tolerances, f32 accumulation kept)
    _, grouped = sample_and_group(npoint, radius, nsample, xyz, points, kfps)
    ref = reference_mlp(np.asarray(grouped), layer_params)
    np.testing.assert_allclose(np.asarray(new_feat), ref, rtol=2e-2, atol=2e-2)
    assert new_xyz.shape == (B, npoint, 3)
    assert new_feat.shape == (B, npoint, mlp[-1])

    print("KERNEL_OK")
</pallas_src>

<mosaic_0001>
module attributes {stable_mosaic.version = 11 : i64} {
  func.func @kernel(%arg0: i32, %arg1: i32, %arg2: memref<1x128x8xbf16, #tpu.memory_space<vmem>>, %arg3: memref<8x16xbf16, #tpu.memory_space<vmem>>, %arg4: memref<1x16xf32, #tpu.memory_space<vmem>>, %arg5: memref<16x128xbf16, #tpu.memory_space<vmem>>, %arg6: memref<1x128xf32, #tpu.memory_space<vmem>>, %arg7: memref<1x16x128xf32, #tpu.memory_space<vmem>>) attributes {dimension_semantics = [#tpu.dimension_semantics<parallel>, #tpu.dimension_semantics<parallel>], iteration_bounds = array<i64: 2, 1>, scalar_prefetch = 0 : i64, scratch_operands = 0 : i64, tpu.core_type = #tpu.core_type<tc>, window_params = [{transform_indices = @transform_0, window_bounds = array<i64: 1, 128, 8>}, {pipeline_mode = #tpu.pipeline_mode<synchronous>, transform_indices = @transform_1, window_bounds = array<i64: 8, 16>}, {pipeline_mode = #tpu.pipeline_mode<synchronous>, transform_indices = @transform_2, window_bounds = array<i64: 1, 16>}, {pipeline_mode = #tpu.pipeline_mode<synchronous>, transform_indices = @transform_3, window_bounds = array<i64: 16, 128>}, {pipeline_mode = #tpu.pipeline_mode<synchronous>, transform_indices = @transform_4, window_bounds = array<i64: 1, 128>}, {transform_indices = @transform_5, window_bounds = array<i64: 1, 16, 128>}]} {
    %c0 = arith.constant 0 : index
    %c0_0 = arith.constant 0 : index
    %c0_1 = arith.constant 0 : index
    %0 = vector.load %arg2[%c0, %c0_0, %c0_1] : memref<1x128x8xbf16, #tpu.memory_space<vmem>>, vector<1x128x8xbf16>
    %1 = vector.shape_cast %0 : vector<1x128x8xbf16> to vector<128x8xbf16>
    %c0_2 = arith.constant 0 : index
    %c0_3 = arith.constant 0 : index
    %2 = vector.load %arg3[%c0_2, %c0_3] : memref<8x16xbf16, #tpu.memory_space<vmem>>, vector<8x16xbf16>
    %c0_4 = arith.constant 0 : index
    %c0_5 = arith.constant 0 : index
    %3 = vector.load %arg4[%c0_4, %c0_5] : memref<1x16xf32, #tpu.memory_space<vmem>>, vector<1x16xf32>
    %cst = arith.constant dense<0.000000e+00> : vector<128x16xf32>
    %4 = tpu.matmul %1, %2, %cst {dimension_numbers = #tpu.dot_dimension_numbers<[1], [0], [0], [1], [0, 0, 1, 1], [], []>} : vector<128x8xbf16>, vector<8x16xbf16>, vector<128x16xf32> -> vector<128x16xf32>
    %5 = vector.broadcast %3 : vector<1x16xf32> to vector<128x16xf32>
    %6 = arith.addf %4, %5 : vector<128x16xf32>
    %cst_6 = arith.constant 0.000000e+00 : f32
    %7 = vector.broadcast %cst_6 : f32 to vector<128x16xf32>
    %8 = arith.maximumf %6, %7 : vector<128x16xf32>
    %9 = arith.truncf %8 : vector<128x16xf32> to vector<128x16xbf16>
    %c0_7 = arith.constant 0 : index
    %c0_8 = arith.constant 0 : index
    %10 = vector.load %arg5[%c0_7, %c0_8] : memref<16x128xbf16, #tpu.memory_space<vmem>>, vector<16x128xbf16>
    %c0_9 = arith.constant 0 : index
    %c0_10 = arith.constant 0 : index
    %11 = vector.load %arg6[%c0_9, %c0_10] : memref<1x128xf32, #tpu.memory_space<vmem>>, vector<1x128xf32>
    %cst_11 = arith.constant dense<0.000000e+00> : vector<128x128xf32>
    %12 = tpu.matmul %9, %10, %cst_11 {dimension_numbers = #tpu.dot_dimension_numbers<[1], [0], [0], [1], [0, 0, 1, 1], [], []>} : vector<128x16xbf16>, vector<16x128xbf16>, vector<128x128xf32> -> vector<128x128xf32>
    %13 = vector.broadcast %11 : vector<1x128xf32> to vector<128x128xf32>
    %14 = arith.addf %12, %13 : vector<128x128xf32>
    %cst_12 = arith.constant 0.000000e+00 : f32
    %15 = vector.broadcast %cst_12 : f32 to vector<128x128xf32>
    %16 = arith.maximumf %14, %15 : vector<128x128xf32>
    %17 = vector.shape_cast %16 : vector<128x128xf32> to vector<16x8x128xf32>
    %cst_13 = arith.constant dense<0xFF800000> : vector<16x128xf32>
    %18 = vector.multi_reduction <maximumf>, %17, %cst_13 [1] : vector<16x8x128xf32> to vector<16x128xf32>
    %c0_14 = arith.constant 0 : index
    %c0_15 = arith.constant 0 : index
    %c0_16 = arith.constant 0 : index
    %19 = vector.load %arg7[%c0_14, %c0_15, %c0_16] : memref<1x16x128xf32, #tpu.memory_space<vmem>>, vector<1x16x128xf32>
    %20 = vector.shape_cast %19 : vector<1x16x128xf32> to vector<16x128xf32>
    %21 = vector.shape_cast %18 : vector<16x128xf32> to vector<1x16x128xf32>
    tpu.vector_store %arg7[%c0_14, %c0_15, %c0_16], %21 {strides = array<i32>} : memref<1x16x128xf32, #tpu.memory_space<vmem>>, vector<1x16x128xf32>,
    return
  }
  func.func @transform_0(%arg0: i32, %arg1: i32) -> (i32, i32, i32) {
    %c0_i32 = arith.constant 0 : i32
    %c0_i32_0 = arith.constant 0 : i32
    return %arg0, %arg1, %c0_i32 : i32, i32, i32
  }
  func.func @transform_1(%arg0: i32, %arg1: i32) -> (i32, i32) {
    %c0_i32 = arith.constant 0 : i32
    %c0_i32_0 = arith.constant 0 : i32
    %c0_i32_1 = arith.constant 0 : i32
    return %c0_i32, %c0_i32_0 : i32, i32
  }
  func.func @transform_2(%arg0: i32, %arg1: i32) -> (i32, i32) {
    %c0_i32 = arith.constant 0 : i32
    %c0_i32_0 = arith.constant 0 : i32
    %c0_i32_1 = arith.constant 0 : i32
    return %c0_i32, %c0_i32_0 : i32, i32
  }
  func.func @transform_3(%arg0: i32, %arg1: i32) -> (i32, i32) {
    %c0_i32 = arith.constant 0 : i32
    %c0_i32_0 = arith.constant 0 : i32
    %c0_i32_1 = arith.constant 0 : i32
    return %c0_i32, %c0_i32_0 : i32, i32
  }
  func.func @transform_4(%arg0: i32, %arg1: i32) -> (i32, i32) {
    %c0_i32 = arith.constant 0 : i32
    %c0_i32_0 = arith.constant 0 : i32
    %c0_i32_1 = arith.constant 0 : i32
    return %c0_i32, %c0_i32_0 : i32, i32
  }
  func.func @transform_5(%arg0: i32, %arg1: i32) -> (i32, i32, i32) {
    %c0_i32 = arith.constant 0 : i32
    %c0_i32_0 = arith.constant 0 : i32
    return %arg0, %arg1, %c0_i32 : i32, i32, i32
  }
}

</mosaic_0001>

<llo_original>
// kernel: tpu_custom_call.1
$region0: #{tpu_custom_call.1}
  #allocation0 [shape = 'u32[]', space=smem, size = 0x4, offset = 0x4, fixed_abs, tag = 'smem constant byte address 0x4 - core index']
  #allocation1 [shape = 'u32[144,128]{1,0:T(1,128)}', space=vmem, size = 0x12000, scoped, tag = 'internal scratch']
  %s0 = inlined_call_operand.vmem [shape: bf16[2,128,8], index: 0, kind: input, shape index: {}]
  %s1 = inlined_call_operand.vmem [shape: bf16[8,16], index: 1, kind: input, shape index: {}]
  %s2 = inlined_call_operand.vmem [shape: f32[1,16], index: 2, kind: input, shape index: {}]
  %s3 = inlined_call_operand.vmem [shape: bf16[16,128], index: 3, kind: input, shape index: {}]
  %s4 = inlined_call_operand.vmem [shape: f32[1,128], index: 4, kind: input, shape index: {}]
  %s5 = inlined_call_operand.hbm [shape: f32[2,16,128], index: 5, kind: output, shape index: {}]
  %s6 = sld [smem:[#allocation0]]
  $region53: #{tpu_custom_call.1} parent=0
    _
  %s8 = ssub.s32 1, %s6
  %s9 = scalar_select 0, %s8, %s6
  $region1: #{tpu_custom_call.1} parent=0
    #allocation2 [shape = 'u8[16384]{0}', space=vmem, size = 0x4000, scoped, tag = 'output window, operand 0']
    #allocation3 [shape = 's32[2]{0}', space=sflag, size = 0x8, scoped, tag = 'scoped memory for tpu_custom_call.1']
    %10 = vsyncpa [#allocation3], 0
    %s11 = scalar_lea.sflag [#allocation3], 1
    %12 = vsyncpa %s11, 0
    loop: start=0, step=1, limit=4
    $region2: #{tpu_custom_call.1} parent=1 // loop_pre_header
      _
    $region3: #{tpu_custom_call.1} parent=1 // loop_header
      %s14 = sphi 0, %s18
      %p15 = scmp.ge.s32.totalorder %s14, 4
      %s21 = sphi 0, %s33
      %s22 = sphi 0, %s29
      %s23 = sphi 0, %s21
      %s24 = sphi 0, %s22
      %s25 = sphi 0, %s23
      %s26 = sphi 0, %s24
      %s38 = sphi 0, %s40
      %s41 = sphi 0, %s38
      %s42 = sphi 0, %s41
      %s58 = sphi 0, %s42
      %s62 = sphi 0, %s62
      %s64 = sphi 0, %s62
      %s65 = sphi 0, %s64
      %s79 = sphi 0, %s65
      %s83 = sphi 0, %s83
      %s85 = sphi 0, %s83
      %s86 = sphi 0, %s85
      %s100 = sphi 0, %s86
      %s104 = sphi 0, %s104
      %s106 = sphi 0, %s104
      %s107 = sphi 0, %s106
      %s121 = sphi 0, %s107
      %s125 = sphi 0, %s125
      %s127 = sphi 0, %s125
      %s128 = sphi 0, %s127
      %s142 = sphi 0, %s128
      %s150 = sphi 0, %s152
      %s153 = sphi 0, %s150
      %s154 = sphi 0, %s153
      %s170 = sphi 0, %s154
    $region4: #{tpu_custom_call.1} parent=1 // loop_header_branch
      %17 = sbr.rel (%p15) target = $region8
    $region5: #{tpu_custom_call.1} parent=1 // loop_body
      %s19 = ssub.s32 %s14, 1
      %s20 = ssub.s32 %s14, 2
      %s27 = sadd.s32 1, %s22
      %p28 = scmp.ge.s32.totalorder %s27, 1
      %s29 = scalar_select %p28, 0, %s27
      %s30 = sadd.s32 1, %s21
      %s31 = scalar_select %p28, %s30, %s21
      %p32 = scmp.ge.s32.totalorder %s31, 2
      %s33 = scalar_select %p32, 0, %s31
      %s34 = ssub.s32 %s21, %s33
      %s35 = ssub.s32 %s22, %s29
      %s36 = sor.u32 %s34, %s35
      %p37 = scmp.eq.s32.totalorder %s36, 0
      %s39 = sadd.s32 %s38, 1
      %s40 = scalar_select %p37, %s38, %s39
      %p43 = pneg %p37
      %p44 = scmp.eq.s32.totalorder %s14, 1
      %p45 = por %p43, %p44
      %p46 = scmp.ne.s32.totalorder %s38, %s41
      %p47 = scmp.eq.s32.totalorder %s14, 0
      %p48 = por %p46, %p47
      %p49 = scmp.ne.s32.totalorder %s38, %s41
      %p50 = scmp.eq.s32.totalorder %s19, 1
      %p51 = por %p49, %p50
      %p52 = scmp.ne.s32.totalorder %s41, %s42
      %p53 = scmp.eq.s32.totalorder %s19, 0
      %p54 = por %p52, %p53
      %p55 = scmp.ne.s32.totalorder %s41, %s42
      %p56 = scmp.eq.s32.totalorder %s20, 1
      %p57 = por %p55, %p56
      %p59 = scmp.ne.s32.totalorder %s42, %s58
      %p60 = scmp.eq.s32.totalorder %s20, 0
      %p61 = por %p59, %p60
      %s63 = sadd.s32 %s62, 1
      %p66 = scmp.eq.s32.totalorder %s14, 1
      %p67 = scmp.ne.s32.totalorder %s62, %s64
      %p68 = scmp.eq.s32.totalorder %s14, 0
      %p69 = por %p67, %p68
      %p70 = scmp.ne.s32.totalorder %s62, %s64
      %p71 = scmp.eq.s32.totalorder %s19, 1
      %p72 = por %p70, %p71
      %p73 = scmp.ne.s32.totalorder %s64, %s65
      %p74 = scmp.eq.s32.totalorder %s19, 0
      %p75 = por %p73, %p74
      %p76 = scmp.ne.s32.totalorder %s64, %s65
      %p77 = scmp.eq.s32.totalorder %s20, 1
      %p78 = por %p76, %p77
      %p80 = scmp.ne.s32.totalorder %s65, %s79
      %p81 = scmp.eq.s32.totalorder %s20, 0
      %p82 = por %p80, %p81
      %s84 = sadd.s32 %s83, 1
      %p87 = scmp.eq.s32.totalorder %s14, 1
      %p88 = scmp.ne.s32.totalorder %s83, %s85
      %p89 = scmp.eq.s32.totalorder %s14, 0
      %p90 = por %p88, %p89
      %p91 = scmp.ne.s32.totalorder %s83, %s85
      %p92 = scmp.eq.s32.totalorder %s19, 1
      %p93 = por %p91, %p92
      %p94 = scmp.ne.s32.totalorder %s85, %s86
      %p95 = scmp.eq.s32.totalorder %s19, 0
      %p96 = por %p94, %p95
      %p97 = scmp.ne.s32.totalorder %s85, %s86
      %p98 = scmp.eq.s32.totalorder %s20, 1
      %p99 = por %p97, %p98
      %p101 = scmp.ne.s32.totalorder %s86, %s100
      %p102 = scmp.eq.s32.totalorder %s20, 0
      %p103 = por %p101, %p102
      %s105 = sadd.s32 %s104, 1
      %p108 = scmp.eq.s32.totalorder %s14, 1
      %p109 = scmp.ne.s32.totalorder %s104, %s106
      %p110 = scmp.eq.s32.totalorder %s14, 0
      %p111 = por %p109, %p110
      %p112 = scmp.ne.s32.totalorder %s104, %s106
      %p113 = scmp.eq.s32.totalorder %s19, 1
      %p114 = por %p112, %p113
      %p115 = scmp.ne.s32.totalorder %s106, %s107
      %p116 = scmp.eq.s32.totalorder %s19, 0
      %p117 = por %p115, %p116
      %p118 = scmp.ne.s32.totalorder %s106, %s107
      %p119 = scmp.eq.s32.totalorder %s20, 1
      %p120 = por %p118, %p119
      %p122 = scmp.ne.s32.totalorder %s107, %s121
      %p123 = scmp.eq.s32.totalorder %s20, 0
      %p124 = por %p122, %p123
      %s126 = sadd.s32 %s125, 1
      %p129 = scmp.eq.s32.totalorder %s14, 1
      %p130 = scmp.ne.s32.totalorder %s125, %s127
      %p131 = scmp.eq.s32.totalorder %s14, 0
      %p132 = por %p130, %p131
      %p133 = scmp.ne.s32.totalorder %s125, %s127
      %p134 = scmp.eq.s32.totalorder %s19, 1
      %p135 = por %p133, %p134
      %p136 = scmp.ne.s32.totalorder %s127, %s128
      %p137 = scmp.eq.s32.totalorder %s19, 0
      %p138 = por %p136, %p137
      %p139 = scmp.ne.s32.totalorder %s127, %s128
      %p140 = scmp.eq.s32.totalorder %s20, 1
      %p141 = por %p139, %p140
      %p143 = scmp.ne.s32.totalorder %s128, %s142
      %p144 = scmp.eq.s32.totalorder %s20, 0
      %p145 = por %p143, %p144
      %s146 = ssub.s32 %s21, %s33
      %s147 = ssub.s32 %s22, %s29
      %s148 = sor.u32 %s146, %s147
      %p149 = scmp.eq.s32.totalorder %s148, 0
      %s151 = sadd.s32 %s150, 1
      %s152 = scalar_select %p149, %s150, %s151
      %p155 = pneg %p149
      %p156 = scmp.eq.s32.totalorder %s14, 1
      %p157 = por %p155, %p156
      %p158 = scmp.ne.s32.totalorder %s150, %s153
      %p159 = scmp.eq.s32.totalorder %s14, 0
      %p160 = por %p158, %p159
      %p161 = scmp.ne.s32.totalorder %s150, %s153
      %p162 = scmp.eq.s32.totalorder %s19, 1
      %p163 = por %p161, %p162
      %p164 = scmp.ne.s32.totalorder %s153, %s154
      %p165 = scmp.eq.s32.totalorder %s19, 0
      %p166 = por %p164, %p165
      %p167 = scmp.ne.s32.totalorder %s153, %s154
      %p168 = scmp.eq.s32.totalorder %s20, 1
      %p169 = por %p167, %p168
      %p171 = scmp.ne.s32.totalorder %s154, %s170
      %p172 = scmp.eq.s32.totalorder %s20, 0
      %p173 = por %p171, %p172
      %p174 = scmp.le.s32.totalorder 1, %s14
      %p175 = scmp.lt.s32.totalorder %s14, 3
      %p176 = pnand %p174, %p175
      %p177 = pneg %p176
      // Predicated region
      $region9: #{tpu_custom_call.1} parent=5 // pred_check
        _
      $region10: #{tpu_custom_call.1} parent=5 // pred_check_branch
        %179 = sbr.rel (%p176) target = $region12
      $region11: #{tpu_custom_call.1} parent=5 // pred_region
        %s180 = ssub.s32 %s14, 1
        // Predicated region
        $region13: #{tpu_custom_call.1} parent=11 // pred_check
          %p181 = pneg %p75
        $region14: #{tpu_custom_call.1} parent=11 // pred_check_branch
          %183 = sbr.rel (%p181) target = $region16
        $region15: #{tpu_custom_call.1} parent=11 // pred_region
          _
        $region16: #{tpu_custom_call.1} parent=11 // pred_fallthru
          _
        // Predicated region
        $region17: #{tpu_custom_call.1} parent=11 // pred_check
          %p184 = pneg %p96
        $region18: #{tpu_custom_call.1} parent=11 // pred_check_branch
          %186 = sbr.rel (%p184) target = $region20
        $region19: #{tpu_custom_call.1} parent=11 // pred_region
          _
        $region20: #{tpu_custom_call.1} parent=11 // pred_fallthru
          _
        // Predicated region
        $region21: #{tpu_custom_call.1} parent=11 // pred_check
          %p187 = pneg %p117
        $region22: #{tpu_custom_call.1} parent=11 // pred_check_branch
          %189 = sbr.rel (%p187) target = $region24
        $region23: #{tpu_custom_call.1} parent=11 // pred_region
          _
        $region24: #{tpu_custom_call.1} parent=11 // pred_fallthru
          _
        // Predicated region
        $region25: #{tpu_custom_call.1} parent=11 // pred_check
          %p190 = pneg %p138
        $region26: #{tpu_custom_call.1} parent=11 // pred_check_branch
          %192 = sbr.rel (%p190) target = $region28
        $region27: #{tpu_custom_call.1} parent=11 // pred_region
          _
        $region28: #{tpu_custom_call.1} parent=11 // pred_fallthru
          _
      $region12: #{tpu_custom_call.1} parent=5 // pred_fallthru
        _
      %p193 = scmp.lt.s32.totalorder %s14, 2
      // Predicated region
      $region29: #{tpu_custom_call.1} parent=5 // pred_check
        %p194 = pneg %p193
      $region30: #{tpu_custom_call.1} parent=5 // pred_check_branch
        %196 = sbr.rel (%p194) target = $region32
      $region31: #{tpu_custom_call.1} parent=5 // pred_region
        // Predicated region
        $region33: #{tpu_custom_call.1} parent=31 // pred_check
          %p197 = pneg %p48
        $region34: #{tpu_custom_call.1} parent=31 // pred_check_branch
          %199 = sbr.rel (%p197) target = $region36
        $region35: #{tpu_custom_call.1} parent=31 // pred_region
          %s200 = smul.u32 16, %s22
          %p201 = scmp.lt.s32.totalorder %s21, 1
          %s202 = scalar_select %p201, %s21, 1
          %p203 = scmp.lt.s32.totalorder %s200, 15
          %s204 = scalar_select %p203, %s200, 15
          %s205 = smul.addr %s202, 16
          %s206 = sadd.s32 %s204, %s205
          %s207 = smul.addr %s206, 4
          %s208 = scalar_lea.vmem %s0, %s207
          %s209 = smul.u32 16, %s22
        $region36: #{tpu_custom_call.1} parent=31 // pred_fallthru
          _
      $region32: #{tpu_custom_call.1} parent=5 // pred_fallthru
        _
      %p210 = scmp.le.s32.totalorder 1, %s14
      %p211 = scmp.lt.s32.totalorder %s14, 3
      %p212 = pnand %p210, %p211
      %p213 = pneg %p212
      // Predicated region
      $region37: #{tpu_custom_call.1} parent=5 // pred_check
        _
      $region38: #{tpu_custom_call.1} parent=5 // pred_check_branch
        %215 = sbr.rel (%p212) target = $region40
      $region39: #{tpu_custom_call.1} parent=5 // pred_region
        %s216 = ssub.s32 %s14, 1
        %s217 = smul.u32 16, %s24
        %p218 = scmp.lt.s32.totalorder %s23, 1
        %s219 = scalar_select %p218, %s23, 1
        %p220 = scmp.lt.s32.totalorder %s217, 15
        %s221 = scalar_select %p220, %s217, 15
        %s222 = smul.addr %s219, 16
        %s223 = sadd.s32 %s221, %s222
        %s224 = smul.addr %s223, 4
        %s225 = scalar_lea.vmem %s0, %s224
        %p226 = pneg %p54
        %p227 = pneg %p51
        %p228 = pneg %p75
        %p229 = pneg %p72
        %p230 = pneg %p96
        %p231 = pneg %p93
        %p232 = pneg %p117
        %p233 = pneg %p114
        %p234 = pneg %p138
        %p235 = pneg %p135
        %p236 = pneg %p166
        %p237 = pneg %p163
        %s238 = sand.u32 %s153, 1
        %s239 = scalar_lea.sflag [#allocation3], %s238
        %s240 = sand.u32 %s153, 1
        %s241 = smul.addr %s240, 16
        %s242 = scalar_lea.vmem [#allocation2], %s241
        %s243 = smul.u32 16, %s24
        %p244 = scmp.lt.s32.totalorder %s23, 1
        %s245 = scalar_select %p244, %s23, 1
        %p246 = scmp.lt.s32.totalorder %s243, 15
        %s247 = scalar_select %p246, %s243, 15
        %s248 = smul.addr %s245, 16
        %s249 = sadd.s32 %s247, %s248
        %s250 = smul.addr %s249, 4
        %s251 = scalar_lea.vmem %s0, %s250
        %s252 = smul.u32 16, %s24
        %s253 = smul.u32 2, %s24
        %v255 = vld [vmem:[%s251] sm:$0xf]
        %v256 = vld [vmem:[%s251 + $0x4] sm:$0xf]
        %v257 = vld [vmem:[%s251 + $0x8] sm:$0xf]
        %v258 = vld [vmem:[%s251 + $0xc] sm:$0xf]
        %v259 = vld [vmem:[%s251 + $0x10] sm:$0xf]
        %v260 = vld [vmem:[%s251 + $0x14] sm:$0xf]
        %v261 = vld [vmem:[%s251 + $0x18] sm:$0xf]
        %v262 = vld [vmem:[%s251 + $0x1c] sm:$0xf]
        %v263 = vld [vmem:[%s251 + $0x20] sm:$0xf]
        %v264 = vld [vmem:[%s251 + $0x24] sm:$0xf]
        %v265 = vld [vmem:[%s251 + $0x28] sm:$0xf]
        %v266 = vld [vmem:[%s251 + $0x2c] sm:$0xf]
        %v267 = vld [vmem:[%s251 + $0x30] sm:$0xf]
        %v268 = vld [vmem:[%s251 + $0x34] sm:$0xf]
        %v269 = vld [vmem:[%s251 + $0x38] sm:$0xf]
        %v270 = vld [vmem:[%s251 + $0x3c] sm:$0xf]
        %v271 = vld [vmem:[%s1] sm:$0xf]
        %v272 = vld [vmem:[%s2] sm:$0x1]
        %v274 = vlaneseq
        %v275 = vshrl.u32 %v274, 7
        %v276 = vsub.s32 0, %v275
        %v277 = vrot.slane %v272, %v276
        %v295 = vunpack.c.l.b16 %v255
        %v296 = vunpack.c.l.b16 %v256
        %v297 = vunpack.c.l.b16 %v257
        %v298 = vunpack.c.l.b16 %v258
        %v299 = vunpack.c.l.b16 %v259
        %v300 = vunpack.c.l.b16 %v260
        %v301 = vunpack.c.l.b16 %v261
        %v302 = vunpack.c.l.b16 %v262
        %v303 = vunpack.c.l.b16 %v263
        %v304 = vunpack.c.l.b16 %v264
        %v305 = vunpack.c.l.b16 %v265
        %v306 = vunpack.c.l.b16 %v266
        %v307 = vunpack.c.l.b16 %v267
        %v308 = vunpack.c.l.b16 %v268
        %v309 = vunpack.c.l.b16 %v269
        %v310 = vunpack.c.l.b16 %v270
        %v311 = vpack.c.b16 %v296, %v295
        %v312 = vpack.c.b16 %v298, %v297
        %v313 = vpack.c.b16 %v300, %v299
        %v314 = vpack.c.b16 %v302, %v301
        %v315 = vpack.c.b16 %v304, %v303
        %v316 = vpack.c.b16 %v306, %v305
        %v317 = vpack.c.b16 %v308, %v307
        %v318 = vpack.c.b16 %v310, %v309
        %vm319 = vcmask 64512
        %v321 = vsel %vm319, %v311, 0
        %v324 = vsel %vm319, %v312, 0
        %v327 = vsel %vm319, %v313, 0
        %v330 = vsel %vm319, %v314, 0
        %v333 = vsel %vm319, %v315, 0
        %v336 = vsel %vm319, %v316, 0
        %v339 = vsel %vm319, %v317, 0
        %v342 = vsel %vm319, %v318, 0
        %vm344 = vcmask 1043456
        %v346 = vsel %vm344, %v271, 0
        %348 = vmatprep.subr.bf16.mxu0 0
        %349 = vmatpush1.bf16.msra.mxu0 %v346
        %350 = vmatprep.subr.bf16.mxu0 0
        %351 = vmatpush1.bf16.msra.mxu0 0
        %352 = vmatprep.subr.bf16.mxu0 0
        %353 = vmatpush1.bf16.msra.mxu0 0
        %354 = vmatprep.subr.bf16.mxu0 0
        %355 = vmatpush1.bf16.msra.mxu0 0
        %356 = vmatprep.subr.bf16.mxu0 0
        %357 = vmatpush1.bf16.msra.mxu0 0
        %358 = vmatprep.subr.bf16.mxu0 0
        %359 = vmatpush1.bf16.msra.mxu0 0
        %360 = vmatprep.subr.bf16.mxu0 0
        %361 = vmatpush1.bf16.msra.mxu0 0
        %362 = vmatprep.subr.bf16.mxu0 0
        %363 = vmatpush1.bf16.msra.mxu0 0
        %364 = vmatprep.subr.bf16.mxu0 0
        %365 = vmatpush1.bf16.msra.mxu0 0
        %366 = vmatprep.subr.bf16.mxu0 0
        %367 = vmatpush1.bf16.msra.mxu0 0
        %368 = vmatprep.subr.bf16.mxu0 0
        %369 = vmatpush1.bf16.msra.mxu0 0
        %370 = vmatprep.subr.bf16.mxu0 0
        %371 = vmatpush1.bf16.msra.mxu0 0
        %372 = vmatprep.subr.bf16.mxu0 0
        %373 = vmatpush1.bf16.msra.mxu0 0
        %374 = vmatprep.subr.bf16.mxu0 0
        %375 = vmatpush1.bf16.msra.mxu0 0
        %376 = vmatprep.subr.bf16.mxu0 0
        %377 = vmatpush1.bf16.msra.mxu0 0
        %378 = vmatprep.subr.bf16.mxu0 0
        %379 = vmatpush1.bf16.msra.mxu0 0
        %380 = vmatprep.mubr.bf16.mxu0 0
        %381 = vmatmul.mubr.bf16.gmra.mrb[0].mxu0 %v321
        %v382 = vpop.f32.mrb[0].mxu0
        %v383 = vadd.f32 %v277, %v382
        %v384 = vpop.f32.mrb[0].mxu0
        %v385 = vpop.f32.mrb[0].mxu0
        %v386 = vadd.f32 %v277, %v385
        %v387 = vpop.f32.mrb[0].mxu0
        %388 = vmatprep.mubr.bf16.mxu0 0
        %389 = vmatmul.mubr.bf16.gmra.mrb[0].mxu0 %v324
        %v390 = vpop.f32.mrb[0].mxu0
        %v391 = vadd.f32 %v277, %v390
        %v392 = vpop.f32.mrb[0].mxu0
        %v393 = vpop.f32.mrb[0].mxu0
        %v394 = vadd.f32 %v277, %v393
        %v395 = vpop.f32.mrb[0].mxu0
        %396 = vmatprep.mubr.bf16.mxu0 0
        %397 = vmatmul.mubr.bf16.gmra.mrb[0].mxu0 %v327
        %v398 = vpop.f32.mrb[0].mxu0
        %v399 = vadd.f32 %v277, %v398
        %v400 = vpop.f32.mrb[0].mxu0
        %v401 = vpop.f32.mrb[0].mxu0
        %v402 = vadd.f32 %v277, %v401
        %v403 = vpop.f32.mrb[0].mxu0
        %404 = vmatprep.mubr.bf16.mxu0 0
        %405 = vmatmul.mubr.bf16.gmra.mrb[0].mxu0 %v330
        %v406 = vpop.f32.mrb[0].mxu0
        %v407 = vadd.f32 %v277, %v406
        %v408 = vpop.f32.mrb[0].mxu0
        %v409 = vpop.f32.mrb[0].mxu0
        %v410 = vadd.f32 %v277, %v409
        %v411 = vpop.f32.mrb[0].mxu0
        %412 = vmatprep.mubr.bf16.mxu0 0
        %413 = vmatmul.mubr.bf16.gmra.mrb[0].mxu0 %v333
        %v414 = vpop.f32.mrb[0].mxu0
        %v415 = vadd.f32 %v277, %v414
        %v416 = vpop.f32.mrb[0].mxu0
        %v417 = vpop.f32.mrb[0].mxu0
        %v418 = vadd.f32 %v277, %v417
        %v419 = vpop.f32.mrb[0].mxu0
        %420 = vmatprep.mubr.bf16.mxu0 0
        %421 = vmatmul.mubr.bf16.gmra.mrb[0].mxu0 %v336
        %v422 = vpop.f32.mrb[0].mxu0
        %v423 = vadd.f32 %v277, %v422
        %v424 = vpop.f32.mrb[0].mxu0
        %v425 = vpop.f32.mrb[0].mxu0
        %v426 = vadd.f32 %v277, %v425
        %v427 = vpop.f32.mrb[0].mxu0
        %428 = vmatprep.mubr.bf16.mxu0 0
        %429 = vmatmul.mubr.bf16.gmra.mrb[0].mxu0 %v339
        %v430 = vpop.f32.mrb[0].mxu0
        %v431 = vadd.f32 %v277, %v430
        %v432 = vpop.f32.mrb[0].mxu0
        %v433 = vpop.f32.mrb[0].mxu0
        %v434 = vadd.f32 %v277, %v433
        %v435 = vpop.f32.mrb[0].mxu0
        %436 = vmatprep.mubr.bf16.mxu0 0
        %437 = vmatmul.mubr.bf16.gmra.mrb[0].mxu0 %v342
        %v438 = vpop.f32.mrb[0].mxu0
        %v439 = vadd.f32 %v277, %v438
        %v440 = vpop.f32.mrb[0].mxu0
        %v441 = vpop.f32.mrb[0].mxu0
        %v442 = vadd.f32 %v277, %v441
        %v443 = vpop.f32.mrb[0].mxu0
        %444 = vdwg.mxu0
        %v445 = vmax.f32 %v383, 0.0
        %v446 = vmax.f32 %v386, 0.0
        %v447 = vmax.f32 %v391, 0.0
        %v448 = vmax.f32 %v394, 0.0
        %v449 = vmax.f32 %v399, 0.0
        %v450 = vmax.f32 %v402, 0.0
        %v451 = vmax.f32 %v407, 0.0
        %v452 = vmax.f32 %v410, 0.0
        %v453 = vmax.f32 %v415, 0.0
        %v454 = vmax.f32 %v418, 0.0
        %v455 = vmax.f32 %v423, 0.0
        %v456 = vmax.f32 %v426, 0.0
        %v457 = vmax.f32 %v431, 0.0
        %v458 = vmax.f32 %v434, 0.0
        %v459 = vmax.f32 %v439, 0.0
        %v460 = vmax.f32 %v442, 0.0
        %v461 = vpack.c.bf16 %v446, %v445
        %v462 = vpack.c.bf16 %v448, %v447
        %v463 = vpack.c.bf16 %v450, %v449
        %v464 = vpack.c.bf16 %v452, %v451
        %v465 = vpack.c.bf16 %v454, %v453
        %v466 = vpack.c.bf16 %v456, %v455
        %v467 = vpack.c.bf16 %v458, %v457
        %v468 = vpack.c.bf16 %v460, %v459
        %v469 = vld [vmem:[%s3] sm:$0xf]
        %v470 = vld [vmem:[%s3 + $0x4] sm:$0xf]
        %v471 = vld [vmem:[%s4] sm:$0x1]
        %v473 = vlaneseq
        %v474 = vshrl.u32 %v473, 7
        %v475 = vsub.s32 0, %v474
        %v476 = vrot.slane %v471, %v475
        %v480 = vunpack.c.l.b16 %v469
        %v481 = vunpack.c.l.b16 %v470
        %v482 = vpack.c.b16 %v481, %v480
        %vm484 = vcmask 130048
        %v486 = vsel %vm484, %v461, 0
        %v489 = vsel %vm484, %v462, 0
        %v492 = vsel %vm484, %v463, 0
        %v495 = vsel %vm484, %v464, 0
        %v498 = vsel %vm484, %v465, 0
        %v501 = vsel %vm484, %v466, 0
        %v504 = vsel %vm484, %v467, 0
        %v507 = vsel %vm484, %v468, 0
        %509 = vmatprep.subr.bf16.mxu0 0
        %510 = vmatpush1.bf16.msra.mxu0 %v482
        %511 = vmatprep.subr.bf16.mxu0 0
        %512 = vmatpush1.bf16.msra.mxu0 0
        %513 = vmatprep.subr.bf16.mxu0 0
        %514 = vmatpush1.bf16.msra.mxu0 0
        %515 = vmatprep.subr.bf16.mxu0 0
        %516 = vmatpush1.bf16.msra.mxu0 0
        %517 = vmatprep.subr.bf16.mxu0 0
        %518 = vmatpush1.bf16.msra.mxu0 0
        %519 = vmatprep.subr.bf16.mxu0 0
        %520 = vmatpush1.bf16.msra.mxu0 0
        %521 = vmatprep.subr.bf16.mxu0 0
        %522 = vmatpush1.bf16.msra.mxu0 0
        %523 = vmatprep.subr.bf16.mxu0 0
        %524 = vmatpush1.bf16.msra.mxu0 0
        %525 = vmatprep.subr.bf16.mxu0 0
        %526 = vmatpush1.bf16.msra.mxu0 0
        %527 = vmatprep.subr.bf16.mxu0 0
        %528 = vmatpush1.bf16.msra.mxu0 0
        %529 = vmatprep.subr.bf16.mxu0 0
        %530 = vmatpush1.bf16.msra.mxu0 0
        %531 = vmatprep.subr.bf16.mxu0 0
        %532 = vmatpush1.bf16.msra.mxu0 0
        %533 = vmatprep.subr.bf16.mxu0 0
        %534 = vmatpush1.bf16.msra.mxu0 0
        %535 = vmatprep.subr.bf16.mxu0 0
        %536 = vmatpush1.bf16.msra.mxu0 0
        %537 = vmatprep.subr.bf16.mxu0 0
        %538 = vmatpush1.bf16.msra.mxu0 0
        %539 = vmatprep.subr.bf16.mxu0 0
        %540 = vmatpush1.bf16.msra.mxu0 0
        %541 = vmatprep.mubr.bf16.mxu0 0
        %542 = vmatmul.mubr.bf16.gmra.mrb[0].mxu0 %v486
        %v543 = vpop.f32.mrb[0].mxu0
        %v544 = vadd.f32 %v476, %v543
        %v545 = vpop.f32.mrb[0].mxu0
        %v546 = vpop.f32.mrb[0].mxu0
        %v547 = vadd.f32 %v476, %v546
        %v548 = vpop.f32.mrb[0].mxu0
        %549 = vmatprep.mubr.bf16.mxu0 0
        %550 = vmatmul.mubr.bf16.gmra.mrb[0].mxu0 %v489
        %v551 = vpop.f32.mrb[0].mxu0
        %v552 = vadd.f32 %v476, %v551
        %v553 = vpop.f32.mrb[0].mxu0
        %v554 = vpop.f32.mrb[0].mxu0
        %v555 = vadd.f32 %v476, %v554
        %v556 = vpop.f32.mrb[0].mxu0
        %557 = vmatprep.mubr.bf16.mxu0 0
        %558 = vmatmul.mubr.bf16.gmra.mrb[0].mxu0 %v492
        %v559 = vpop.f32.mrb[0].mxu0
        %v560 = vadd.f32 %v476, %v559
        %v561 = vpop.f32.mrb[0].mxu0
        %v562 = vpop.f32.mrb[0].mxu0
        %v563 = vadd.f32 %v476, %v562
        %v564 = vpop.f32.mrb[0].mxu0
        %565 = vmatprep.mubr.bf16.mxu0 0
        %566 = vmatmul.mubr.bf16.gmra.mrb[0].mxu0 %v495
        %v567 = vpop.f32.mrb[0].mxu0
        %v568 = vadd.f32 %v476, %v567
        %v569 = vpop.f32.mrb[0].mxu0
        %v570 = vpop.f32.mrb[0].mxu0
        %v571 = vadd.f32 %v476, %v570
        %v572 = vpop.f32.mrb[0].mxu0
        %573 = vmatprep.mubr.bf16.mxu0 0
        %574 = vmatmul.mubr.bf16.gmra.mrb[0].mxu0 %v498
        %v575 = vpop.f32.mrb[0].mxu0
        %v576 = vadd.f32 %v476, %v575
        %v577 = vpop.f32.mrb[0].mxu0
        %v578 = vpop.f32.mrb[0].mxu0
        %v579 = vadd.f32 %v476, %v578
        %v580 = vpop.f32.mrb[0].mxu0
        %581 = vmatprep.mubr.bf16.mxu0 0
        %582 = vmatmul.mubr.bf16.gmra.mrb[0].mxu0 %v501
        %v583 = vpop.f32.mrb[0].mxu0
        %v584 = vadd.f32 %v476, %v583
        %v585 = vpop.f32.mrb[0].mxu0
        %v586 = vpop.f32.mrb[0].mxu0
        %v587 = vadd.f32 %v476, %v586
        %v588 = vpop.f32.mrb[0].mxu0
        %589 = vmatprep.mubr.bf16.mxu0 0
        %590 = vmatmul.mubr.bf16.gmra.mrb[0].mxu0 %v504
        %v591 = vpop.f32.mrb[0].mxu0
        %v592 = vadd.f32 %v476, %v591
        %v593 = vpop.f32.mrb[0].mxu0
        %v594 = vpop.f32.mrb[0].mxu0
        %v595 = vadd.f32 %v476, %v594
        %v596 = vpop.f32.mrb[0].mxu0
        %597 = vmatprep.mubr.bf16.mxu0 0
        %598 = vmatmul.mubr.bf16.gmra.mrb[0].mxu0 %v507
        %v599 = vpop.f32.mrb[0].mxu0
        %v600 = vadd.f32 %v476, %v599
        %v601 = vpop.f32.mrb[0].mxu0
        %v602 = vpop.f32.mrb[0].mxu0
        %v603 = vadd.f32 %v476, %v602
        %v604 = vpop.f32.mrb[0].mxu0
        %605 = vdwg.mxu0
        %v606 = vmax.f32 %v544, 0.0
        %v607 = vmax.f32 %v547, 0.0
        %v608 = vmax.f32 %v552, 0.0
        %v609 = vmax.f32 %v555, 0.0
        %v610 = vmax.f32 %v560, 0.0
        %v611 = vmax.f32 %v563, 0.0
        %v612 = vmax.f32 %v568, 0.0
        %v613 = vmax.f32 %v571, 0.0
        %v614 = vmax.f32 %v576, 0.0
        %v615 = vmax.f32 %v579, 0.0
        %v616 = vmax.f32 %v584, 0.0
        %v617 = vmax.f32 %v587, 0.0
        %v618 = vmax.f32 %v592, 0.0
        %v619 = vmax.f32 %v595, 0.0
        %v620 = vmax.f32 %v600, 0.0
        %v621 = vmax.f32 %v603, 0.0
        %v622 = vrot.slane %v606, 4
        %v623 = vmax.f32 %v606, %v622
        %v624 = vrot.slane %v623, 2
        %v625 = vmax.f32 %v623, %v624
        %v626 = vrot.slane %v625, 1
        %v627 = vmax.f32 %v625, %v626
        %v628 = vrot.slane %v607, 4
        %v629 = vmax.f32 %v607, %v628
        %v630 = vrot.slane %v629, 2
        %v631 = vmax.f32 %v629, %v630
        %v632 = vrot.slane %v631, 1
        %v633 = vmax.f32 %v631, %v632
        %v634 = vrot.slane %v608, 4
        %v635 = vmax.f32 %v608, %v634
        %v636 = vrot.slane %v635, 2
        %v637 = vmax.f32 %v635, %v636
        %v638 = vrot.slane %v637, 1
        %v639 = vmax.f32 %v637, %v638
        %v640 = vrot.slane %v609, 4
        %v641 = vmax.f32 %v609, %v640
        %v642 = vrot.slane %v641, 2
        %v643 = vmax.f32 %v641, %v642
        %v644 = vrot.slane %v643, 1
        %v645 = vmax.f32 %v643, %v644
        %v646 = vrot.slane %v610, 4
        %v647 = vmax.f32 %v610, %v646
        %v648 = vrot.slane %v647, 2
        %v649 = vmax.f32 %v647, %v648
        %v650 = vrot.slane %v649, 1
        %v651 = vmax.f32 %v649, %v650
        %v652 = vrot.slane %v611, 4
        %v653 = vmax.f32 %v611, %v652
        %v654 = vrot.slane %v653, 2
        %v655 = vmax.f32 %v653, %v654
        %v656 = vrot.slane %v655, 1
        %v657 = vmax.f32 %v655, %v656
        %v658 = vrot.slane %v612, 4
        %v659 = vmax.f32 %v612, %v658
        %v660 = vrot.slane %v659, 2
        %v661 = vmax.f32 %v659, %v660
        %v662 = vrot.slane %v661, 1
        %v663 = vmax.f32 %v661, %v662
        %v664 = vrot.slane %v613, 4
        %v665 = vmax.f32 %v613, %v664
        %v666 = vrot.slane %v665, 2
        %v667 = vmax.f32 %v665, %v666
        %v668 = vrot.slane %v667, 1
        %v669 = vmax.f32 %v667, %v668
        %v670 = vrot.slane %v614, 4
        %v671 = vmax.f32 %v614, %v670
        %v672 = vrot.slane %v671, 2
        %v673 = vmax.f32 %v671, %v672
        %v674 = vrot.slane %v673, 1
        %v675 = vmax.f32 %v673, %v674
        %v676 = vrot.slane %v615, 4
        %v677 = vmax.f32 %v615, %v676
        %v678 = vrot.slane %v677, 2
        %v679 = vmax.f32 %v677, %v678
        %v680 = vrot.slane %v679, 1
        %v681 = vmax.f32 %v679, %v680
        %v682 = vrot.slane %v616, 4
        %v683 = vmax.f32 %v616, %v682
        %v684 = vrot.slane %v683, 2
        %v685 = vmax.f32 %v683, %v684
        %v686 = vrot.slane %v685, 1
        %v687 = vmax.f32 %v685, %v686
        %v688 = vrot.slane %v617, 4
        %v689 = vmax.f32 %v617, %v688
        %v690 = vrot.slane %v689, 2
        %v691 = vmax.f32 %v689, %v690
        %v692 = vrot.slane %v691, 1
        %v693 = vmax.f32 %v691, %v692
        %v694 = vrot.slane %v618, 4
        %v695 = vmax.f32 %v618, %v694
        %v696 = vrot.slane %v695, 2
        %v697 = vmax.f32 %v695, %v696
        %v698 = vrot.slane %v697, 1
        %v699 = vmax.f32 %v697, %v698
        %v700 = vrot.slane %v619, 4
        %v701 = vmax.f32 %v619, %v700
        %v702 = vrot.slane %v701, 2
        %v703 = vmax.f32 %v701, %v702
        %v704 = vrot.slane %v703, 1
        %v705 = vmax.f32 %v703, %v704
        %v706 = vrot.slane %v620, 4
        %v707 = vmax.f32 %v620, %v706
        %v708 = vrot.slane %v707, 2
        %v709 = vmax.f32 %v707, %v708
        %v710 = vrot.slane %v709, 1
        %v711 = vmax.f32 %v709, %v710
        %v712 = vrot.slane %v621, 4
        %v713 = vmax.f32 %v621, %v712
        %v714 = vrot.slane %v713, 2
        %v715 = vmax.f32 %v713, %v714
        %v716 = vrot.slane %v715, 1
        %v717 = vmax.f32 %v715, %v716
        %vm734 = vcmask 1041409
        %v735 = vsel %vm734, %v633, %v627
        %vm736 = vcmask 1042434
        %v737 = vsel %vm736, %v639, %v735
        %vm738 = vcmask 1043459
        %v739 = vsel %vm738, %v645, %v737
        %vm740 = vcmask 1044484
        %v741 = vsel %vm740, %v651, %v739
        %vm742 = vcmask 1045509
        %v743 = vsel %vm742, %v657, %v741
        %vm744 = vcmask 1046534
        %v745 = vsel %vm744, %v663, %v743
        %vm746 = vcmask 1047559
        %v747 = vsel %vm746, %v669, %v745
        %v748 = vsel %vm734, %v681, %v675
        %v749 = vsel %vm736, %v687, %v748
        %v750 = vsel %vm738, %v693, %v749
        %v751 = vsel %vm740, %v699, %v750
        %v752 = vsel %vm742, %v705, %v751
        %v753 = vsel %vm744, %v711, %v752
        %v754 = vsel %vm746, %v717, %v753
        %757 = vst [vmem:[%s242] sm:$0xff] %v747
        %758 = vst [vmem:[%s242 + $0x8] sm:$0xff] %v754
        %s759 = sand.u32 %s153, 1
        %s760 = scalar_lea.sflag [#allocation3], %s759
        %s761 = sand.u32 %s153, 1
        %s762 = smul.addr %s761, 16
        %s763 = scalar_lea.vmem [#allocation2], %s762
        // Predicated region
        $region41: #{tpu_custom_call.1} parent=39 // pred_check
          %p764 = pneg %p163
        $region42: #{tpu_custom_call.1} parent=39 // pred_check_branch
          %766 = sbr.rel (%p764) target = $region44
        $region43: #{tpu_custom_call.1} parent=39 // pred_region
          %s767 = smul.u32 2, %s24
          %s769 = ssub.s32 256, 256
          %770 = vsyncadd %s760, %s769
          %s771 = smul.addr %s23, 2
          %s772 = sadd.s32 %s767, %s771
          %s773 = smul.addr %s772, 128
          %s774 = scalar_lea.hbm %s5, %s773
          %s775 = sshll.u32 %s763, 4
          %s776 = int_to_ptr.vmem [resolvable:$true] %s775
          %781 = dma.vmem_to_hbm [thread:$0]  %s776, 256, %s774, %s760, 128, 128, 8
        $region44: #{tpu_custom_call.1} parent=39 // pred_fallthru
          _
      $region40: #{tpu_custom_call.1} parent=5 // pred_fallthru
        _
      %p782 = scmp.le.s32.totalorder 2, %s14
      // Predicated region
      $region45: #{tpu_custom_call.1} parent=5 // pred_check
        %p783 = pneg %p782
      $region46: #{tpu_custom_call.1} parent=5 // pred_check_branch
        %785 = sbr.rel (%p783) target = $region48
      $region47: #{tpu_custom_call.1} parent=5 // pred_region
        %s786 = ssub.s32 %s14, 2
        // Predicated region
        $region49: #{tpu_custom_call.1} parent=47 // pred_check
          %p787 = pneg %p169
        $region50: #{tpu_custom_call.1} parent=47 // pred_check_branch
          %789 = sbr.rel (%p787) target = $region52
        $region51: #{tpu_custom_call.1} parent=47 // pred_region
          %s790 = sand.u32 %s154, 1
          %s791 = scalar_lea.sflag [#allocation3], %s790
          %s792 = sand.u32 %s154, 1
          %s793 = smul.addr %s792, 16
          %s794 = scalar_lea.vmem [#allocation2], %s793
          %795 = dma.done %s791, 256
        $region52: #{tpu_custom_call.1} parent=47 // pred_fallthru
          _
      $region48: #{tpu_custom_call.1} parent=5 // pred_fallthru
        _
    $region6: #{tpu_custom_call.1} parent=1 // loop_footer
      %s18 = sadd.s32 1, %s14
    $region7: #{tpu_custom_call.1} parent=1 // loop_footer_branch
      %13 = sbr.rel target = $region3
    $region8: #{tpu_custom_call.1} parent=1 // loop_exit
      _
    %796 = vsyncpa [#allocation3], 1
    %s797 = scalar_lea.sflag [#allocation3], 1
    %798 = vsyncpa %s797, 1

</llo_original>
